<compile_context>
chip_gen: v6e
topology: v6e:2x2x1
jax: 0.10.0
libtpu: 0.0.40
codegen_flags: <defaults>
</compile_context>

<pallas_src>
import jax
import jax.numpy as jnp
from jax.experimental import pallas as pl
from jax.experimental.pallas import tpu as pltpu


# ----------------------------------------------------------------------------
# Fused kernel: encoder (conv-matmul + ReLU + global pool) + decoder + sampling
# One grid step == one batch element.
# ----------------------------------------------------------------------------
def _ingredients_kernel(patches_ref, cw_ref, cb_ref, wp_ref, bp_ref, wv_ref,
                        sl_ref, g_ref, ids_ref):
    # patches_ref: (1, HW, P)  bf16    cw_ref: (P, C)  bf16    cb_ref: (1, C)  f32
    # wp_ref:      (C, Hd)     bf16    bp_ref: (1, Hd) f32     wv_ref: (Hd, V) bf16
    # sl_ref:      (T, V)      f32  (precomputed emb @ Wv + bv)
    # g_ref:       (1, T, V)   f32  (Gumbel noise)
    # ids_ref:     (1, 1, T)   int32

    # ---- encoder: 3x3 "same" conv as one 2-D matmul + bias + ReLU + global avg pool ----
    p = patches_ref[0]                                                  # (HW, P) bf16
    y = jnp.dot(p, cw_ref[...], preferred_element_type=jnp.float32)    # (HW, C) f32, lane-dense
    y = jnp.maximum(y + cb_ref[...], 0.0)                              # bias + ReLU (f32)
    feat = jnp.mean(y, axis=0, keepdims=True)                          # (1, C) global avg pool

    # ---- decoder: projection + tanh, image logits, per-step logits via broadcast add ----
    hidden = jnp.tanh(
        jnp.dot(feat.astype(jnp.bfloat16), wp_ref[...],
                preferred_element_type=jnp.float32) + bp_ref[...]
    )                                                                   # (1, Hd) f32
    img_logits = jnp.dot(hidden.astype(jnp.bfloat16), wv_ref[...],
                         preferred_element_type=jnp.float32)            # (1, V) f32
    logits = img_logits[:, None, :] + sl_ref[...][None, :, :]           # (1, T, V)

    # greedy=False -> multinomial sampling == argmax(logits + Gumbel noise)
    z = logits + g_ref[...]                                             # (1, T, V) f32

    # argmax over vocab (max + iota + min; matches jnp.argmax tie-breaking, robust lowering --
    # single-reduce jnp.argmax is not universally supported by Mosaic).
    m = jnp.max(z, axis=-1, keepdims=True)                              # (1, T, 1)
    idx = jax.lax.broadcasted_iota(jnp.int32, z.shape, dimension=2)
    vocab = z.shape[-1]
    ids = jnp.min(jnp.where(z >= m, idx, vocab), axis=-1)               # (1, T) int32
    ids_ref[...] = ids[:, None, :].astype(jnp.int32)                    # (1, 1, T)


def ingredients_fused(patches, conv_w, conv_b, wp, bp, wv, step_logits, gumbel):
    B, HW, P = patches.shape
    C = conv_w.shape[1]
    Hd = wp.shape[1]
    T, V = step_logits.shape

    ids3 = pl.pallas_call(
        _ingredients_kernel,
        out_shape=jax.ShapeDtypeStruct((B, 1, T), jnp.int32),
        grid=(B,),
        in_specs=[
            pl.BlockSpec((1, HW, P), lambda b: (b, 0, 0)),   # per-batch patch tile
            pl.BlockSpec((P, C),     lambda b: (0, 0)),      # weights: resident across grid
            pl.BlockSpec((1, C),     lambda b: (0, 0)),
            pl.BlockSpec((C, Hd),    lambda b: (0, 0)),
            pl.BlockSpec((1, Hd),    lambda b: (0, 0)),
            pl.BlockSpec((Hd, V),    lambda b: (0, 0)),
            pl.BlockSpec((T, V),     lambda b: (0, 0)),
            pl.BlockSpec((1, T, V),  lambda b: (b, 0, 0)),   # per-batch Gumbel noise
        ],
        out_specs=pl.BlockSpec((1, 1, T), lambda b: (b, 0, 0)),
        compiler_params=pltpu.CompilerParams(
            dimension_semantics=("parallel",),               # batch shards across v7x's 2 TCs
        ),
    )(patches, conv_w, conv_b, wp, bp, wv, step_logits, gumbel)
    return ids3.reshape(B, T)


# ----------------------------------------------------------------------------
# Glue: im2col (channel-last, no transpose pass) + precompute + full forward
# ----------------------------------------------------------------------------
@jax.jit
def ingredients_forward(image, params, key):
    # image: (B, Cin, H, W)  NCHW, PyTorch conv convention
    B = image.shape[0]
    P_pad = params["conv_w"].shape[0]

    # im2col for the 3x3 "same" conv, emitted directly with the patch/feature dim LAST
    # (no extra HBM transpose pass over the patch buffer).
    patches = jax.lax.conv_general_dilated_patches(
        image, filter_shape=(3, 3), window_strides=(1, 1), padding="SAME",
        dimension_numbers=("NCHW", "OIHW", "NHWC"),
    )                                                        # (B, H, W, Cin*9)
    _, H, W, P0 = patches.shape
    patches = patches.reshape(B, H * W, P0)
    patches = jnp.pad(patches, ((0, 0), (0, 0), (0, P_pad - P0)))  # 27 -> 32 (zeros)
    patches = patches.astype(jnp.bfloat16)

    # Input-independent decoder precompute: per-step logits contribution emb @ Wv + bv  (T, V).
    step_logits = (jnp.dot(params["emb"], params["wv"]) + params["bv"]).astype(jnp.float32)

    # greedy=False -> multinomial sampling via Gumbel-max; noise generated host-side with
    # jax.random (in-kernel pltpu.prng_* has no interpret/CPU lowering) and passed in.
    T, V = step_logits.shape
    gumbel = jax.random.gumbel(key, (B, T, V), jnp.float32)

    return ingredients_fused(
        patches,
        params["conv_w"].astype(jnp.bfloat16),
        params["conv_b"],
        params["wp"].astype(jnp.bfloat16),
        params["bp"],
        params["wv"].astype(jnp.bfloat16),
        step_logits,
        gumbel,
    )


def init_params(key, cin=3, cout=64, hidden=128, vocab=128, max_ingr=8, kh=3, kw=3,
                c_pad=128, p_pad=32):
    """Synthetic stand-in parameters. cout (64->128) and patch dim (27->32) are zero-padded so
    every MXU tile / feature vector is lane-aligned; padding is exactly neutral numerically."""
    ks = jax.random.split(key, 4)
    P0 = cin * kh * kw  # 27

    conv_w = jnp.zeros((p_pad, c_pad), jnp.float32)
    conv_w = conv_w.at[:P0, :cout].set(
        jax.random.normal(ks[0], (P0, cout), jnp.float32) * 0.1)
    conv_b = jnp.zeros((1, c_pad), jnp.float32)

    wp = jnp.zeros((c_pad, hidden), jnp.float32)
    wp = wp.at[:cout, :].set(jax.random.normal(ks[1], (cout, hidden), jnp.float32) * 0.1)

    return {
        "conv_w": conv_w,                                   # (32, 128)
        "conv_b": conv_b,                                   # (1, 128)
        "wp": wp,                                           # (128, 128)
        "bp": jnp.zeros((1, hidden), jnp.float32),          # (1, 128)
        "emb": jax.random.normal(ks[2], (max_ingr, hidden), jnp.float32) * 0.1,   # (8, 128)
        "wv": jax.random.normal(ks[3], (hidden, vocab), jnp.float32) * 0.1,       # (128, 128)
        "bv": jnp.zeros((1, vocab), jnp.float32),           # (1, 128)
    }


if __name__ == "__main__":
    key = jax.random.PRNGKey(0)
    k_img, k_params, k_sample = jax.random.split(key, 3)

    # Small shapes consistent with the module's forward (NCHW image input).
    B, Cin, H, W = 2, 3, 16, 16
    image = jax.random.normal(k_img, (B, Cin, H, W), jnp.float32)

    params = init_params(k_params)

    ids = ingredients_forward(image, params, k_sample)      # (B, max_ingr) int32 ingredient ids
    jax.block_until_ready(ids)

    assert ids.shape == (2, 8) and ids.dtype == jnp.int32
    assert bool(jnp.all(ids >= 0)) and bool(jnp.all(ids < 128))
    print("KERNEL_OK")
</pallas_src>

<mosaic_0001>
module attributes {stable_mosaic.version = 11 : i64} {
  func.func @_ingredients_kernel(%arg0: i32, %arg1: memref<1x256x32xbf16, #tpu.memory_space<vmem>>, %arg2: memref<32x128xbf16, #tpu.memory_space<vmem>>, %arg3: memref<1x128xf32, #tpu.memory_space<vmem>>, %arg4: memref<128x128xbf16, #tpu.memory_space<vmem>>, %arg5: memref<1x128xf32, #tpu.memory_space<vmem>>, %arg6: memref<128x128xbf16, #tpu.memory_space<vmem>>, %arg7: memref<8x128xf32, #tpu.memory_space<vmem>>, %arg8: memref<1x8x128xf32, #tpu.memory_space<vmem>>, %arg9: memref<1x1x8xi32, #tpu.memory_space<vmem>>) attributes {dimension_semantics = [#tpu.dimension_semantics<parallel>], iteration_bounds = array<i64: 2>, scalar_prefetch = 0 : i64, scratch_operands = 0 : i64, tpu.core_type = #tpu.core_type<tc>, window_params = [{transform_indices = @transform_0, window_bounds = array<i64: 1, 256, 32>}, {pipeline_mode = #tpu.pipeline_mode<synchronous>, transform_indices = @transform_1, window_bounds = array<i64: 32, 128>}, {pipeline_mode = #tpu.pipeline_mode<synchronous>, transform_indices = @transform_2, window_bounds = array<i64: 1, 128>}, {pipeline_mode = #tpu.pipeline_mode<synchronous>, transform_indices = @transform_3, window_bounds = array<i64: 128, 128>}, {pipeline_mode = #tpu.pipeline_mode<synchronous>, transform_indices = @transform_4, window_bounds = array<i64: 1, 128>}, {pipeline_mode = #tpu.pipeline_mode<synchronous>, transform_indices = @transform_5, window_bounds = array<i64: 128, 128>}, {pipeline_mode = #tpu.pipeline_mode<synchronous>, transform_indices = @transform_6, window_bounds = array<i64: 8, 128>}, {transform_indices = @transform_7, window_bounds = array<i64: 1, 8, 128>}, {transform_indices = @transform_8, window_bounds = array<i64: 1, 1, 8>}]} {
    %c0 = arith.constant 0 : index
    %c0_0 = arith.constant 0 : index
    %c0_1 = arith.constant 0 : index
    %0 = vector.load %arg1[%c0, %c0_0, %c0_1] : memref<1x256x32xbf16, #tpu.memory_space<vmem>>, vector<1x256x32xbf16>
    %1 = vector.shape_cast %0 : vector<1x256x32xbf16> to vector<256x32xbf16>
    %c0_2 = arith.constant 0 : index
    %c0_3 = arith.constant 0 : index
    %2 = vector.load %arg2[%c0_2, %c0_3] : memref<32x128xbf16, #tpu.memory_space<vmem>>, vector<32x128xbf16>
    %cst = arith.constant dense<0.000000e+00> : vector<256x128xf32>
    %3 = tpu.matmul %1, %2, %cst {dimension_numbers = #tpu.dot_dimension_numbers<[1], [0], [0], [1], [0, 0, 1, 1], [], []>} : vector<256x32xbf16>, vector<32x128xbf16>, vector<256x128xf32> -> vector<256x128xf32>
    %c0_4 = arith.constant 0 : index
    %c0_5 = arith.constant 0 : index
    %4 = vector.load %arg3[%c0_4, %c0_5] : memref<1x128xf32, #tpu.memory_space<vmem>>, vector<1x128xf32>
    %5 = vector.broadcast %4 : vector<1x128xf32> to vector<256x128xf32>
    %6 = arith.addf %3, %5 : vector<256x128xf32>
    %cst_6 = arith.constant 0.000000e+00 : f32
    %7 = vector.broadcast %cst_6 : f32 to vector<256x128xf32>
    %8 = arith.maximumf %6, %7 : vector<256x128xf32>
    %cst_7 = arith.constant dense<0.000000e+00> : vector<128xf32>
    %9 = vector.multi_reduction <add>, %8, %cst_7 [0] : vector<256x128xf32> to vector<128xf32>
    %10 = vector.shape_cast %9 : vector<128xf32> to vector<1x128xf32>
    %cst_8 = arith.constant 2.560000e+02 : f32
    %11 = vector.broadcast %cst_8 : f32 to vector<1x128xf32>
    %12 = arith.divf %10, %11 : vector<1x128xf32>
    %13 = arith.truncf %12 : vector<1x128xf32> to vector<1x128xbf16>
    %c0_9 = arith.constant 0 : index
    %c0_10 = arith.constant 0 : index
    %14 = vector.load %arg4[%c0_9, %c0_10] : memref<128x128xbf16, #tpu.memory_space<vmem>>, vector<128x128xbf16>
    %cst_11 = arith.constant dense<0.000000e+00> : vector<1x128xf32>
    %15 = tpu.matmul %13, %14, %cst_11 {dimension_numbers = #tpu.dot_dimension_numbers<[1], [0], [0], [1], [0, 0, 1, 1], [], []>} : vector<1x128xbf16>, vector<128x128xbf16>, vector<1x128xf32> -> vector<1x128xf32>
    %c0_12 = arith.constant 0 : index
    %c0_13 = arith.constant 0 : index
    %16 = vector.load %arg5[%c0_12, %c0_13] : memref<1x128xf32, #tpu.memory_space<vmem>>, vector<1x128xf32>
    %17 = arith.addf %15, %16 : vector<1x128xf32>
    %18 = math.tanh %17 : vector<1x128xf32>
    %19 = arith.truncf %18 : vector<1x128xf32> to vector<1x128xbf16>
    %c0_14 = arith.constant 0 : index
    %c0_15 = arith.constant 0 : index
    %20 = vector.load %arg6[%c0_14, %c0_15] : memref<128x128xbf16, #tpu.memory_space<vmem>>, vector<128x128xbf16>
    %cst_16 = arith.constant dense<0.000000e+00> : vector<1x128xf32>
    %21 = tpu.matmul %19, %20, %cst_16 {dimension_numbers = #tpu.dot_dimension_numbers<[1], [0], [0], [1], [0, 0, 1, 1], [], []>} : vector<1x128xbf16>, vector<128x128xbf16>, vector<1x128xf32> -> vector<1x128xf32>
    %22 = vector.shape_cast %21 : vector<1x128xf32> to vector<1x1x128xf32>
    %c0_17 = arith.constant 0 : index
    %c0_18 = arith.constant 0 : index
    %23 = vector.load %arg7[%c0_17, %c0_18] : memref<8x128xf32, #tpu.memory_space<vmem>>, vector<8x128xf32>
    %24 = vector.shape_cast %23 : vector<8x128xf32> to vector<1x8x128xf32>
    %25 = vector.broadcast %22 : vector<1x1x128xf32> to vector<1x8x128xf32>
    %26 = arith.addf %25, %24 : vector<1x8x128xf32>
    %c0_19 = arith.constant 0 : index
    %c0_20 = arith.constant 0 : index
    %c0_21 = arith.constant 0 : index
    %27 = vector.load %arg8[%c0_19, %c0_20, %c0_21] : memref<1x8x128xf32, #tpu.memory_space<vmem>>, vector<1x8x128xf32>
    %28 = arith.addf %26, %27 : vector<1x8x128xf32>
    %cst_22 = arith.constant dense<0xFF800000> : vector<1x8xf32>
    %29 = vector.multi_reduction <maximumf>, %28, %cst_22 [2] : vector<1x8x128xf32> to vector<1x8xf32>
    %30 = vector.shape_cast %29 : vector<1x8xf32> to vector<1x8x1xf32>
    %31 = tpu.iota {dimensions = array<i32: 2>} : vector<1x8x128xi32>
    %32 = vector.broadcast %30 : vector<1x8x1xf32> to vector<1x8x128xf32>
    %33 = arith.cmpf oge, %28, %32 : vector<1x8x128xf32>
    %c128_i32 = arith.constant 128 : i32
    %34 = vector.broadcast %c128_i32 : i32 to vector<1x8x128xi32>
    %35 = arith.select %33, %31, %34 : vector<1x8x128xi1>, vector<1x8x128xi32>
    %cst_23 = arith.constant dense<2147483647> : vector<1x8xi32>
    %36 = vector.multi_reduction <minsi>, %35, %cst_23 [2] : vector<1x8x128xi32> to vector<1x8xi32>
    %37 = vector.shape_cast %36 : vector<1x8xi32> to vector<1x1x8xi32>
    %c0_24 = arith.constant 0 : index
    %c0_25 = arith.constant 0 : index
    %c0_26 = arith.constant 0 : index
    %38 = vector.load %arg9[%c0_24, %c0_25, %c0_26] : memref<1x1x8xi32, #tpu.memory_space<vmem>>, vector<1x1x8xi32>
    tpu.vector_store %arg9[%c0_24, %c0_25, %c0_26], %37 {strides = array<i32>} : memref<1x1x8xi32, #tpu.memory_space<vmem>>, vector<1x1x8xi32>,
    return
  }
  func.func @transform_0(%arg0: i32) -> (i32, i32, i32) {
    %c0_i32 = arith.constant 0 : i32
    %c0_i32_0 = arith.constant 0 : i32
    %c0_i32_1 = arith.constant 0 : i32
    return %arg0, %c0_i32, %c0_i32_0 : i32, i32, i32
  }
  func.func @transform_1(%arg0: i32) -> (i32, i32) {
    %c0_i32 = arith.constant 0 : i32
    %c0_i32_0 = arith.constant 0 : i32
    %c0_i32_1 = arith.constant 0 : i32
    return %c0_i32, %c0_i32_0 : i32, i32
  }
  func.func @transform_2(%arg0: i32) -> (i32, i32) {
    %c0_i32 = arith.constant 0 : i32
    %c0_i32_0 = arith.constant 0 : i32
    %c0_i32_1 = arith.constant 0 : i32
    return %c0_i32, %c0_i32_0 : i32, i32
  }
  func.func @transform_3(%arg0: i32) -> (i32, i32) {
    %c0_i32 = arith.constant 0 : i32
    %c0_i32_0 = arith.constant 0 : i32
    %c0_i32_1 = arith.constant 0 : i32
    return %c0_i32, %c0_i32_0 : i32, i32
  }
  func.func @transform_4(%arg0: i32) -> (i32, i32) {
    %c0_i32 = arith.constant 0 : i32
    %c0_i32_0 = arith.constant 0 : i32
    %c0_i32_1 = arith.constant 0 : i32
    return %c0_i32, %c0_i32_0 : i32, i32
  }
  func.func @transform_5(%arg0: i32) -> (i32, i32) {
    %c0_i32 = arith.constant 0 : i32
    %c0_i32_0 = arith.constant 0 : i32
    %c0_i32_1 = arith.constant 0 : i32
    return %c0_i32, %c0_i32_0 : i32, i32
  }
  func.func @transform_6(%arg0: i32) -> (i32, i32) {
    %c0_i32 = arith.constant 0 : i32
    %c0_i32_0 = arith.constant 0 : i32
    %c0_i32_1 = arith.constant 0 : i32
    return %c0_i32, %c0_i32_0 : i32, i32
  }
  func.func @transform_7(%arg0: i32) -> (i32, i32, i32) {
    %c0_i32 = arith.constant 0 : i32
    %c0_i32_0 = arith.constant 0 : i32
    %c0_i32_1 = arith.constant 0 : i32
    return %arg0, %c0_i32, %c0_i32_0 : i32, i32, i32
  }
  func.func @transform_8(%arg0: i32) -> (i32, i32, i32) {
    %c0_i32 = arith.constant 0 : i32
    %c0_i32_0 = arith.constant 0 : i32
    %c0_i32_1 = arith.constant 0 : i32
    return %arg0, %c0_i32, %c0_i32_0 : i32, i32, i32
  }
}

</mosaic_0001>

<llo_original>
// kernel: ingredients_forward.1
$region0: #{ingredients_forward.1}
  #allocation0 [shape = 'u32[]', space=smem, size = 0x4, offset = 0x4, fixed_abs, tag = 'smem constant byte address 0x4 - core index']
  #allocation1 [shape = 'u32[144,128]{1,0:T(1,128)}', space=vmem, size = 0x12000, scoped, tag = 'internal scratch']
  %s0 = inlined_call_operand.vmem [shape: bf16[2,256,32], index: 0, kind: input, shape index: {}]
  %s1 = inlined_call_operand.vmem [shape: bf16[32,128], index: 1, kind: input, shape index: {}]
  %s2 = inlined_call_operand.vmem [shape: f32[1,128], index: 2, kind: input, shape index: {}]
  %s3 = inlined_call_operand.vmem [shape: bf16[128,128], index: 3, kind: input, shape index: {}]
  %s4 = inlined_call_operand.vmem [shape: f32[1,128], index: 4, kind: input, shape index: {}]
  %s5 = inlined_call_operand.vmem [shape: bf16[128,128], index: 5, kind: input, shape index: {}]
  %s6 = inlined_call_operand.vmem [shape: f32[8,128], index: 6, kind: input, shape index: {}]
  %s7 = inlined_call_operand.vmem [shape: f32[2,8,128], index: 7, kind: input, shape index: {}]
  %s8 = inlined_call_operand.hbm [shape: s32[2,1,8], index: 8, kind: output, shape index: {}]
  %s9 = sld [smem:[#allocation0]]
  $region65: #{ingredients_forward.1} parent=0
    _
  %s11 = ssub.s32 1, %s9
  %s12 = scalar_select 0, %s11, %s9
  $region1: #{ingredients_forward.1} parent=0
    #allocation2 [shape = 'u8[1024]{0}', space=vmem, size = 0x400, scoped, tag = 'output window, operand 0']
    #allocation3 [shape = 's32[2]{0}', space=sflag, size = 0x8, scoped, tag = 'scoped memory for ingredients_forward.1']
    %13 = vsyncpa [#allocation3], 0
    %s14 = scalar_lea.sflag [#allocation3], 1
    %15 = vsyncpa %s14, 0
    loop: start=0, step=1, limit=4
    $region2: #{ingredients_forward.1} parent=1 // loop_pre_header
      _
    $region3: #{ingredients_forward.1} parent=1 // loop_header
      %s17 = sphi 0, %s21
      %p18 = scmp.ge.s32.totalorder %s17, 4
      %s27 = sphi 0, %s29
      %s30 = sphi 0, %s27
      %s31 = sphi 0, %s30
      %s47 = sphi 0, %s31
      %s51 = sphi 0, %s51
      %s53 = sphi 0, %s51
      %s54 = sphi 0, %s53
      %s68 = sphi 0, %s54
      %s72 = sphi 0, %s72
      %s74 = sphi 0, %s72
      %s75 = sphi 0, %s74
      %s89 = sphi 0, %s75
      %s93 = sphi 0, %s93
      %s95 = sphi 0, %s93
      %s96 = sphi 0, %s95
      %s110 = sphi 0, %s96
      %s114 = sphi 0, %s114
      %s116 = sphi 0, %s114
      %s117 = sphi 0, %s116
      %s131 = sphi 0, %s117
      %s135 = sphi 0, %s135
      %s137 = sphi 0, %s135
      %s138 = sphi 0, %s137
      %s152 = sphi 0, %s138
      %s156 = sphi 0, %s156
      %s158 = sphi 0, %s156
      %s159 = sphi 0, %s158
      %s173 = sphi 0, %s159
      %s179 = sphi 0, %s181
      %s182 = sphi 0, %s179
      %s183 = sphi 0, %s182
      %s199 = sphi 0, %s183
      %s205 = sphi 0, %s207
      %s208 = sphi 0, %s205
      %s209 = sphi 0, %s208
      %s225 = sphi 0, %s209
    $region4: #{ingredients_forward.1} parent=1 // loop_header_branch
      %20 = sbr.rel (%p18) target = $region8
    $region5: #{ingredients_forward.1} parent=1 // loop_body
      %s22 = ssub.s32 %s17, 1
      %s23 = ssub.s32 %s17, 2
      %s24 = sadd.s32 %s17, 1
      %s25 = ssub.s32 %s17, %s24
      %p26 = scmp.eq.s32.totalorder %s25, 0
      %s28 = sadd.s32 %s27, 1
      %s29 = scalar_select %p26, %s27, %s28
      %p32 = pneg %p26
      %p33 = scmp.eq.s32.totalorder %s17, 1
      %p34 = por %p32, %p33
      %p35 = scmp.ne.s32.totalorder %s27, %s30
      %p36 = scmp.eq.s32.totalorder %s17, 0
      %p37 = por %p35, %p36
      %p38 = scmp.ne.s32.totalorder %s27, %s30
      %p39 = scmp.eq.s32.totalorder %s22, 1
      %p40 = por %p38, %p39
      %p41 = scmp.ne.s32.totalorder %s30, %s31
      %p42 = scmp.eq.s32.totalorder %s22, 0
      %p43 = por %p41, %p42
      %p44 = scmp.ne.s32.totalorder %s30, %s31
      %p45 = scmp.eq.s32.totalorder %s23, 1
      %p46 = por %p44, %p45
      %p48 = scmp.ne.s32.totalorder %s31, %s47
      %p49 = scmp.eq.s32.totalorder %s23, 0
      %p50 = por %p48, %p49
      %s52 = sadd.s32 %s51, 1
      %p55 = scmp.eq.s32.totalorder %s17, 1
      %p56 = scmp.ne.s32.totalorder %s51, %s53
      %p57 = scmp.eq.s32.totalorder %s17, 0
      %p58 = por %p56, %p57
      %p59 = scmp.ne.s32.totalorder %s51, %s53
      %p60 = scmp.eq.s32.totalorder %s22, 1
      %p61 = por %p59, %p60
      %p62 = scmp.ne.s32.totalorder %s53, %s54
      %p63 = scmp.eq.s32.totalorder %s22, 0
      %p64 = por %p62, %p63
      %p65 = scmp.ne.s32.totalorder %s53, %s54
      %p66 = scmp.eq.s32.totalorder %s23, 1
      %p67 = por %p65, %p66
      %p69 = scmp.ne.s32.totalorder %s54, %s68
      %p70 = scmp.eq.s32.totalorder %s23, 0
      %p71 = por %p69, %p70
      %s73 = sadd.s32 %s72, 1
      %p76 = scmp.eq.s32.totalorder %s17, 1
      %p77 = scmp.ne.s32.totalorder %s72, %s74
      %p78 = scmp.eq.s32.totalorder %s17, 0
      %p79 = por %p77, %p78
      %p80 = scmp.ne.s32.totalorder %s72, %s74
      %p81 = scmp.eq.s32.totalorder %s22, 1
      %p82 = por %p80, %p81
      %p83 = scmp.ne.s32.totalorder %s74, %s75
      %p84 = scmp.eq.s32.totalorder %s22, 0
      %p85 = por %p83, %p84
      %p86 = scmp.ne.s32.totalorder %s74, %s75
      %p87 = scmp.eq.s32.totalorder %s23, 1
      %p88 = por %p86, %p87
      %p90 = scmp.ne.s32.totalorder %s75, %s89
      %p91 = scmp.eq.s32.totalorder %s23, 0
      %p92 = por %p90, %p91
      %s94 = sadd.s32 %s93, 1
      %p97 = scmp.eq.s32.totalorder %s17, 1
      %p98 = scmp.ne.s32.totalorder %s93, %s95
      %p99 = scmp.eq.s32.totalorder %s17, 0
      %p100 = por %p98, %p99
      %p101 = scmp.ne.s32.totalorder %s93, %s95
      %p102 = scmp.eq.s32.totalorder %s22, 1
      %p103 = por %p101, %p102
      %p104 = scmp.ne.s32.totalorder %s95, %s96
      %p105 = scmp.eq.s32.totalorder %s22, 0
      %p106 = por %p104, %p105
      %p107 = scmp.ne.s32.totalorder %s95, %s96
      %p108 = scmp.eq.s32.totalorder %s23, 1
      %p109 = por %p107, %p108
      %p111 = scmp.ne.s32.totalorder %s96, %s110
      %p112 = scmp.eq.s32.totalorder %s23, 0
      %p113 = por %p111, %p112
      %s115 = sadd.s32 %s114, 1
      %p118 = scmp.eq.s32.totalorder %s17, 1
      %p119 = scmp.ne.s32.totalorder %s114, %s116
      %p120 = scmp.eq.s32.totalorder %s17, 0
      %p121 = por %p119, %p120
      %p122 = scmp.ne.s32.totalorder %s114, %s116
      %p123 = scmp.eq.s32.totalorder %s22, 1
      %p124 = por %p122, %p123
      %p125 = scmp.ne.s32.totalorder %s116, %s117
      %p126 = scmp.eq.s32.totalorder %s22, 0
      %p127 = por %p125, %p126
      %p128 = scmp.ne.s32.totalorder %s116, %s117
      %p129 = scmp.eq.s32.totalorder %s23, 1
      %p130 = por %p128, %p129
      %p132 = scmp.ne.s32.totalorder %s117, %s131
      %p133 = scmp.eq.s32.totalorder %s23, 0
      %p134 = por %p132, %p133
      %s136 = sadd.s32 %s135, 1
      %p139 = scmp.eq.s32.totalorder %s17, 1
      %p140 = scmp.ne.s32.totalorder %s135, %s137
      %p141 = scmp.eq.s32.totalorder %s17, 0
      %p142 = por %p140, %p141
      %p143 = scmp.ne.s32.totalorder %s135, %s137
      %p144 = scmp.eq.s32.totalorder %s22, 1
      %p145 = por %p143, %p144
      %p146 = scmp.ne.s32.totalorder %s137, %s138
      %p147 = scmp.eq.s32.totalorder %s22, 0
      %p148 = por %p146, %p147
      %p149 = scmp.ne.s32.totalorder %s137, %s138
      %p150 = scmp.eq.s32.totalorder %s23, 1
      %p151 = por %p149, %p150
      %p153 = scmp.ne.s32.totalorder %s138, %s152
      %p154 = scmp.eq.s32.totalorder %s23, 0
      %p155 = por %p153, %p154
      %s157 = sadd.s32 %s156, 1
      %p160 = scmp.eq.s32.totalorder %s17, 1
      %p161 = scmp.ne.s32.totalorder %s156, %s158
      %p162 = scmp.eq.s32.totalorder %s17, 0
      %p163 = por %p161, %p162
      %p164 = scmp.ne.s32.totalorder %s156, %s158
      %p165 = scmp.eq.s32.totalorder %s22, 1
      %p166 = por %p164, %p165
      %p167 = scmp.ne.s32.totalorder %s158, %s159
      %p168 = scmp.eq.s32.totalorder %s22, 0
      %p169 = por %p167, %p168
      %p170 = scmp.ne.s32.totalorder %s158, %s159
      %p171 = scmp.eq.s32.totalorder %s23, 1
      %p172 = por %p170, %p171
      %p174 = scmp.ne.s32.totalorder %s159, %s173
      %p175 = scmp.eq.s32.totalorder %s23, 0
      %p176 = por %p174, %p175
      %s177 = ssub.s32 %s17, %s24
      %p178 = scmp.eq.s32.totalorder %s177, 0
      %s180 = sadd.s32 %s179, 1
      %s181 = scalar_select %p178, %s179, %s180
      %p184 = pneg %p178
      %p185 = scmp.eq.s32.totalorder %s17, 1
      %p186 = por %p184, %p185
      %p187 = scmp.ne.s32.totalorder %s179, %s182
      %p188 = scmp.eq.s32.totalorder %s17, 0
      %p189 = por %p187, %p188
      %p190 = scmp.ne.s32.totalorder %s179, %s182
      %p191 = scmp.eq.s32.totalorder %s22, 1
      %p192 = por %p190, %p191
      %p193 = scmp.ne.s32.totalorder %s182, %s183
      %p194 = scmp.eq.s32.totalorder %s22, 0
      %p195 = por %p193, %p194
      %p196 = scmp.ne.s32.totalorder %s182, %s183
      %p197 = scmp.eq.s32.totalorder %s23, 1
      %p198 = por %p196, %p197
      %p200 = scmp.ne.s32.totalorder %s183, %s199
      %p201 = scmp.eq.s32.totalorder %s23, 0
      %p202 = por %p200, %p201
      %s203 = ssub.s32 %s17, %s24
      %p204 = scmp.eq.s32.totalorder %s203, 0
      %s206 = sadd.s32 %s205, 1
      %s207 = scalar_select %p204, %s205, %s206
      %p210 = pneg %p204
      %p211 = scmp.eq.s32.totalorder %s17, 1
      %p212 = por %p210, %p211
      %p213 = scmp.ne.s32.totalorder %s205, %s208
      %p214 = scmp.eq.s32.totalorder %s17, 0
      %p215 = por %p213, %p214
      %p216 = scmp.ne.s32.totalorder %s205, %s208
      %p217 = scmp.eq.s32.totalorder %s22, 1
      %p218 = por %p216, %p217
      %p219 = scmp.ne.s32.totalorder %s208, %s209
      %p220 = scmp.eq.s32.totalorder %s22, 0
      %p221 = por %p219, %p220
      %p222 = scmp.ne.s32.totalorder %s208, %s209
      %p223 = scmp.eq.s32.totalorder %s23, 1
      %p224 = por %p222, %p223
      %p226 = scmp.ne.s32.totalorder %s209, %s225
      %p227 = scmp.eq.s32.totalorder %s23, 0
      %p228 = por %p226, %p227
      %p229 = scmp.le.s32.totalorder 1, %s17
      %p230 = scmp.lt.s32.totalorder %s17, 3
      %p231 = pnand %p229, %p230
      %p232 = pneg %p231
      // Predicated region
      $region9: #{ingredients_forward.1} parent=5 // pred_check
        _
      $region10: #{ingredients_forward.1} parent=5 // pred_check_branch
        %234 = sbr.rel (%p231) target = $region12
      $region11: #{ingredients_forward.1} parent=5 // pred_region
        %s235 = ssub.s32 %s17, 1
        // Predicated region
        $region13: #{ingredients_forward.1} parent=11 // pred_check
          %p236 = pneg %p64
        $region14: #{ingredients_forward.1} parent=11 // pred_check_branch
          %238 = sbr.rel (%p236) target = $region16
        $region15: #{ingredients_forward.1} parent=11 // pred_region
          _
        $region16: #{ingredients_forward.1} parent=11 // pred_fallthru
          _
        // Predicated region
        $region17: #{ingredients_forward.1} parent=11 // pred_check
          %p239 = pneg %p85
        $region18: #{ingredients_forward.1} parent=11 // pred_check_branch
          %241 = sbr.rel (%p239) target = $region20
        $region19: #{ingredients_forward.1} parent=11 // pred_region
          _
        $region20: #{ingredients_forward.1} parent=11 // pred_fallthru
          _
        // Predicated region
        $region21: #{ingredients_forward.1} parent=11 // pred_check
          %p242 = pneg %p106
        $region22: #{ingredients_forward.1} parent=11 // pred_check_branch
          %244 = sbr.rel (%p242) target = $region24
        $region23: #{ingredients_forward.1} parent=11 // pred_region
          _
        $region24: #{ingredients_forward.1} parent=11 // pred_fallthru
          _
        // Predicated region
        $region25: #{ingredients_forward.1} parent=11 // pred_check
          %p245 = pneg %p127
        $region26: #{ingredients_forward.1} parent=11 // pred_check_branch
          %247 = sbr.rel (%p245) target = $region28
        $region27: #{ingredients_forward.1} parent=11 // pred_region
          _
        $region28: #{ingredients_forward.1} parent=11 // pred_fallthru
          _
        // Predicated region
        $region29: #{ingredients_forward.1} parent=11 // pred_check
          %p248 = pneg %p148
        $region30: #{ingredients_forward.1} parent=11 // pred_check_branch
          %250 = sbr.rel (%p248) target = $region32
        $region31: #{ingredients_forward.1} parent=11 // pred_region
          _
        $region32: #{ingredients_forward.1} parent=11 // pred_fallthru
          _
        // Predicated region
        $region33: #{ingredients_forward.1} parent=11 // pred_check
          %p251 = pneg %p169
        $region34: #{ingredients_forward.1} parent=11 // pred_check_branch
          %253 = sbr.rel (%p251) target = $region36
        $region35: #{ingredients_forward.1} parent=11 // pred_region
          _
        $region36: #{ingredients_forward.1} parent=11 // pred_fallthru
          _
      $region12: #{ingredients_forward.1} parent=5 // pred_fallthru
        _
      %p254 = scmp.lt.s32.totalorder %s17, 2
      // Predicated region
      $region37: #{ingredients_forward.1} parent=5 // pred_check
        %p255 = pneg %p254
      $region38: #{ingredients_forward.1} parent=5 // pred_check_branch
        %257 = sbr.rel (%p255) target = $region40
      $region39: #{ingredients_forward.1} parent=5 // pred_region
        // Predicated region
        $region41: #{ingredients_forward.1} parent=39 // pred_check
          %p258 = pneg %p37
        $region42: #{ingredients_forward.1} parent=39 // pred_check_branch
          %260 = sbr.rel (%p258) target = $region44
        $region43: #{ingredients_forward.1} parent=39 // pred_region
          %p261 = scmp.lt.s32.totalorder %s17, 1
          %s262 = scalar_select %p261, %s17, 1
          %s263 = smul.addr %s262, 32
          %s264 = smul.addr %s263, 4
          %s265 = scalar_lea.vmem %s0, %s264
        $region44: #{ingredients_forward.1} parent=39 // pred_fallthru
          _
        // Predicated region
        $region45: #{ingredients_forward.1} parent=39 // pred_check
          %p266 = pneg %p189
        $region46: #{ingredients_forward.1} parent=39 // pred_check_branch
          %268 = sbr.rel (%p266) target = $region48
        $region47: #{ingredients_forward.1} parent=39 // pred_region
          %p269 = scmp.lt.s32.totalorder %s17, 1
          %s270 = scalar_select %p269, %s17, 1
          %s271 = smul.addr %s270, 8
          %s272 = scalar_lea.vmem %s7, %s271
        $region48: #{ingredients_forward.1} parent=39 // pred_fallthru
          _
      $region40: #{ingredients_forward.1} parent=5 // pred_fallthru
        _
      %p273 = scmp.le.s32.totalorder 1, %s17
      %p274 = scmp.lt.s32.totalorder %s17, 3
      %p275 = pnand %p273, %p274
      %p276 = pneg %p275
      // Predicated region
      $region49: #{ingredients_forward.1} parent=5 // pred_check
        _
      $region50: #{ingredients_forward.1} parent=5 // pred_check_branch
        %278 = sbr.rel (%p275) target = $region52
      $region51: #{ingredients_forward.1} parent=5 // pred_region
        %s279 = ssub.s32 %s17, 1
        %p280 = scmp.lt.s32.totalorder %s22, 1
        %s281 = scalar_select %p280, %s22, 1
        %s282 = smul.addr %s281, 32
        %s283 = smul.addr %s282, 4
        %s284 = scalar_lea.vmem %s0, %s283
        %p285 = pneg %p43
        %p286 = pneg %p40
        %p287 = pneg %p64
        %p288 = pneg %p61
        %p289 = pneg %p85
        %p290 = pneg %p82
        %p291 = pneg %p106
        %p292 = pneg %p103
        %p293 = pneg %p127
        %p294 = pneg %p124
        %p295 = pneg %p148
        %p296 = pneg %p145
        %p297 = pneg %p169
        %p298 = pneg %p166
        %p299 = scmp.lt.s32.totalorder %s22, 1
        %s300 = scalar_select %p299, %s22, 1
        %s301 = smul.addr %s300, 8
        %s302 = scalar_lea.vmem %s7, %s301
        %p303 = pneg %p195
        %p304 = pneg %p192
        %p305 = pneg %p221
        %p306 = pneg %p218
        %s307 = sand.u32 %s208, 1
        %s308 = scalar_lea.sflag [#allocation3], %s307
        %s309 = sand.u32 %s208, 1
        %s310 = scalar_lea.vmem [#allocation2], %s309
        %p311 = scmp.lt.s32.totalorder %s22, 1
        %s312 = scalar_select %p311, %s22, 1
        %s313 = smul.addr %s312, 32
        %s314 = smul.addr %s313, 4
        %s315 = scalar_lea.vmem %s0, %s314
        %p316 = scmp.lt.s32.totalorder %s22, 1
        %s317 = scalar_select %p316, %s22, 1
        %s318 = smul.addr %s317, 8
        %s319 = scalar_lea.vmem %s7, %s318
        %v321 = vld [vmem:[%s315] sm:$0xf]
        %v322 = vld [vmem:[%s315 + $0x4] sm:$0xf]
        %v323 = vld [vmem:[%s315 + $0x8] sm:$0xf]
        %v324 = vld [vmem:[%s315 + $0xc] sm:$0xf]
        %v325 = vld [vmem:[%s315 + $0x10] sm:$0xf]
        %v326 = vld [vmem:[%s315 + $0x14] sm:$0xf]
        %v327 = vld [vmem:[%s315 + $0x18] sm:$0xf]
        %v328 = vld [vmem:[%s315 + $0x1c] sm:$0xf]
        %v329 = vld [vmem:[%s315 + $0x20] sm:$0xf]
        %v330 = vld [vmem:[%s315 + $0x24] sm:$0xf]
        %v331 = vld [vmem:[%s315 + $0x28] sm:$0xf]
        %v332 = vld [vmem:[%s315 + $0x2c] sm:$0xf]
        %v333 = vld [vmem:[%s315 + $0x30] sm:$0xf]
        %v334 = vld [vmem:[%s315 + $0x34] sm:$0xf]
        %v335 = vld [vmem:[%s315 + $0x38] sm:$0xf]
        %v336 = vld [vmem:[%s315 + $0x3c] sm:$0xf]
        %v337 = vld [vmem:[%s315 + $0x40] sm:$0xf]
        %v338 = vld [vmem:[%s315 + $0x44] sm:$0xf]
        %v339 = vld [vmem:[%s315 + $0x48] sm:$0xf]
        %v340 = vld [vmem:[%s315 + $0x4c] sm:$0xf]
        %v341 = vld [vmem:[%s315 + $0x50] sm:$0xf]
        %v342 = vld [vmem:[%s315 + $0x54] sm:$0xf]
        %v343 = vld [vmem:[%s315 + $0x58] sm:$0xf]
        %v344 = vld [vmem:[%s315 + $0x5c] sm:$0xf]
        %v345 = vld [vmem:[%s315 + $0x60] sm:$0xf]
        %v346 = vld [vmem:[%s315 + $0x64] sm:$0xf]
        %v347 = vld [vmem:[%s315 + $0x68] sm:$0xf]
        %v348 = vld [vmem:[%s315 + $0x6c] sm:$0xf]
        %v349 = vld [vmem:[%s315 + $0x70] sm:$0xf]
        %v350 = vld [vmem:[%s315 + $0x74] sm:$0xf]
        %v351 = vld [vmem:[%s315 + $0x78] sm:$0xf]
        %v352 = vld [vmem:[%s315 + $0x7c] sm:$0xf]
        %v353 = vld [vmem:[%s1] sm:$0xf]
        %v354 = vld [vmem:[%s1 + $0x4] sm:$0xf]
        %v355 = vld [vmem:[%s1 + $0x8] sm:$0xf]
        %v356 = vld [vmem:[%s1 + $0xc] sm:$0xf]
        %v357 = vld [vmem:[%s2] sm:$0x1]
        %v359 = vlaneseq
        %v360 = vshrl.u32 %v359, 7
        %v361 = vsub.s32 0, %v360
        %v362 = vrot.slane %v357, %v361
        %v396 = vunpack.c.l.b16 %v321
        %v397 = vunpack.c.l.b16 %v322
        %v398 = vunpack.c.l.b16 %v323
        %v399 = vunpack.c.l.b16 %v324
        %v400 = vunpack.c.l.b16 %v325
        %v401 = vunpack.c.l.b16 %v326
        %v402 = vunpack.c.l.b16 %v327
        %v403 = vunpack.c.l.b16 %v328
        %v404 = vunpack.c.l.b16 %v329
        %v405 = vunpack.c.l.b16 %v330
        %v406 = vunpack.c.l.b16 %v331
        %v407 = vunpack.c.l.b16 %v332
        %v408 = vunpack.c.l.b16 %v333
        %v409 = vunpack.c.l.b16 %v334
        %v410 = vunpack.c.l.b16 %v335
        %v411 = vunpack.c.l.b16 %v336
        %v412 = vunpack.c.l.b16 %v337
        %v413 = vunpack.c.l.b16 %v338
        %v414 = vunpack.c.l.b16 %v339
        %v415 = vunpack.c.l.b16 %v340
        %v416 = vunpack.c.l.b16 %v341
        %v417 = vunpack.c.l.b16 %v342
        %v418 = vunpack.c.l.b16 %v343
        %v419 = vunpack.c.l.b16 %v344
        %v420 = vunpack.c.l.b16 %v345
        %v421 = vunpack.c.l.b16 %v346
        %v422 = vunpack.c.l.b16 %v347
        %v423 = vunpack.c.l.b16 %v348
        %v424 = vunpack.c.l.b16 %v349
        %v425 = vunpack.c.l.b16 %v350
        %v426 = vunpack.c.l.b16 %v351
        %v427 = vunpack.c.l.b16 %v352
        %v428 = vpack.c.b16 %v397, %v396
        %v429 = vpack.c.b16 %v399, %v398
        %v430 = vpack.c.b16 %v401, %v400
        %v431 = vpack.c.b16 %v403, %v402
        %v432 = vpack.c.b16 %v405, %v404
        %v433 = vpack.c.b16 %v407, %v406
        %v434 = vpack.c.b16 %v409, %v408
        %v435 = vpack.c.b16 %v411, %v410
        %v436 = vpack.c.b16 %v413, %v412
        %v437 = vpack.c.b16 %v415, %v414
        %v438 = vpack.c.b16 %v417, %v416
        %v439 = vpack.c.b16 %v419, %v418
        %v440 = vpack.c.b16 %v421, %v420
        %v441 = vpack.c.b16 %v423, %v422
        %v442 = vpack.c.b16 %v425, %v424
        %v443 = vpack.c.b16 %v427, %v426
        %v448 = vunpack.c.l.b16 %v353
        %v449 = vunpack.c.l.b16 %v354
        %v450 = vunpack.c.l.b16 %v355
        %v451 = vunpack.c.l.b16 %v356
        %v452 = vpack.c.b16 %v449, %v448
        %v453 = vpack.c.b16 %v451, %v450
        %vm456 = vcmask 261120
        %v458 = vsel %vm456, %v428, 0
        %v461 = vsel %vm456, %v429, 0
        %v464 = vsel %vm456, %v430, 0
        %v467 = vsel %vm456, %v431, 0
        %v470 = vsel %vm456, %v432, 0
        %v473 = vsel %vm456, %v433, 0
        %v476 = vsel %vm456, %v434, 0
        %v479 = vsel %vm456, %v435, 0
        %v482 = vsel %vm456, %v436, 0
        %v485 = vsel %vm456, %v437, 0
        %v488 = vsel %vm456, %v438, 0
        %v491 = vsel %vm456, %v439, 0
        %v494 = vsel %vm456, %v440, 0
        %v497 = vsel %vm456, %v441, 0
        %v500 = vsel %vm456, %v442, 0
        %v503 = vsel %vm456, %v443, 0
        %505 = vmatprep.subr.bf16.mxu0 0
        %506 = vmatpush1.bf16.msra.mxu0 0
        %507 = vmatprep.subr.bf16.mxu0 0
        %508 = vmatpush1.bf16.msra.mxu0 0
        %509 = vmatprep.subr.bf16.mxu0 0
        %510 = vmatpush1.bf16.msra.mxu0 0
        %511 = vmatprep.subr.bf16.mxu0 0
        %512 = vmatpush1.bf16.msra.mxu0 0
        %513 = vmatprep.subr.bf16.mxu0 0
        %514 = vmatpush1.bf16.msra.mxu0 0
        %515 = vmatprep.subr.bf16.mxu0 0
        %516 = vmatpush1.bf16.msra.mxu0 0
        %517 = vmatprep.subr.bf16.mxu0 0
        %518 = vmatpush1.bf16.msra.mxu0 %v453
        %519 = vmatprep.subr.bf16.mxu0 0
        %520 = vmatpush1.bf16.msra.mxu0 %v452
        %521 = vmatprep.subr.bf16.mxu0 0
        %522 = vmatpush2.bf16.msra.mxu0 0
        %523 = vmatprep.subr.bf16.mxu0 0
        %524 = vmatpush2.bf16.msra.mxu0 0
        %525 = vmatprep.subr.bf16.mxu0 0
        %526 = vmatpush2.bf16.msra.mxu0 0
        %527 = vmatprep.subr.bf16.mxu0 0
        %528 = vmatpush2.bf16.msra.mxu0 0
        %529 = vmatprep.subr.bf16.mxu0 0
        %530 = vmatpush2.bf16.msra.mxu0 0
        %531 = vmatprep.subr.bf16.mxu0 0
        %532 = vmatpush2.bf16.msra.mxu0 0
        %533 = vmatprep.subr.bf16.mxu0 0
        %534 = vmatpush2.bf16.msra.mxu0 0
        %535 = vmatprep.subr.bf16.mxu0 0
        %536 = vmatpush2.bf16.msra.mxu0 0
        %537 = vmatprep.mubr.bf16.mxu0 0
        %538 = vmatmul.mubr.bf16.gmra.mxu0 %v458
        %v539 = vpop.f32.mrf.mxu0
        %v540 = vadd.f32 %v362, %v539
        %v541 = vpop.f32.mrf.mxu0
        %v542 = vpop.f32.mrf.mxu0
        %v543 = vadd.f32 %v362, %v542
        %v544 = vpop.f32.mrf.mxu0
        %545 = vmatprep.mubr.bf16.mxu0 0
        %546 = vmatmul.mubr.bf16.gmra.mxu0 %v461
        %v547 = vpop.f32.mrf.mxu0
        %v548 = vadd.f32 %v362, %v547
        %v549 = vpop.f32.mrf.mxu0
        %v550 = vpop.f32.mrf.mxu0
        %v551 = vadd.f32 %v362, %v550
        %v552 = vpop.f32.mrf.mxu0
        %553 = vmatprep.mubr.bf16.mxu0 0
        %554 = vmatmul.mubr.bf16.gmra.mxu0 %v464
        %v555 = vpop.f32.mrf.mxu0
        %v556 = vadd.f32 %v362, %v555
        %v557 = vpop.f32.mrf.mxu0
        %v558 = vpop.f32.mrf.mxu0
        %v559 = vadd.f32 %v362, %v558
        %v560 = vpop.f32.mrf.mxu0
        %561 = vmatprep.mubr.bf16.mxu0 0
        %562 = vmatmul.mubr.bf16.gmra.mxu0 %v467
        %v563 = vpop.f32.mrf.mxu0
        %v564 = vadd.f32 %v362, %v563
        %v565 = vpop.f32.mrf.mxu0
        %v566 = vpop.f32.mrf.mxu0
        %v567 = vadd.f32 %v362, %v566
        %v568 = vpop.f32.mrf.mxu0
        %569 = vmatprep.mubr.bf16.mxu0 0
        %570 = vmatmul.mubr.bf16.gmra.mxu0 %v470
        %v571 = vpop.f32.mrf.mxu0
        %v572 = vadd.f32 %v362, %v571
        %v573 = vpop.f32.mrf.mxu0
        %v574 = vpop.f32.mrf.mxu0
        %v575 = vadd.f32 %v362, %v574
        %v576 = vpop.f32.mrf.mxu0
        %577 = vmatprep.mubr.bf16.mxu0 0
        %578 = vmatmul.mubr.bf16.gmra.mxu0 %v473
        %v579 = vpop.f32.mrf.mxu0
        %v580 = vadd.f32 %v362, %v579
        %v581 = vpop.f32.mrf.mxu0
        %v582 = vpop.f32.mrf.mxu0
        %v583 = vadd.f32 %v362, %v582
        %v584 = vpop.f32.mrf.mxu0
        %585 = vmatprep.mubr.bf16.mxu0 0
        %586 = vmatmul.mubr.bf16.gmra.mxu0 %v476
        %v587 = vpop.f32.mrf.mxu0
        %v588 = vadd.f32 %v362, %v587
        %v589 = vpop.f32.mrf.mxu0
        %v590 = vpop.f32.mrf.mxu0
        %v591 = vadd.f32 %v362, %v590
        %v592 = vpop.f32.mrf.mxu0
        %593 = vmatprep.mubr.bf16.mxu0 0
        %594 = vmatmul.mubr.bf16.gmra.mxu0 %v479
        %v595 = vpop.f32.mrf.mxu0
        %v596 = vadd.f32 %v362, %v595
        %v597 = vpop.f32.mrf.mxu0
        %v598 = vpop.f32.mrf.mxu0
        %v599 = vadd.f32 %v362, %v598
        %v600 = vpop.f32.mrf.mxu0
        %601 = vmatprep.mubr.bf16.mxu0 0
        %602 = vmatmul.mubr.bf16.gmra.mxu0 %v482
        %v603 = vpop.f32.mrf.mxu0
        %v604 = vadd.f32 %v362, %v603
        %v605 = vpop.f32.mrf.mxu0
        %v606 = vpop.f32.mrf.mxu0
        %v607 = vadd.f32 %v362, %v606
        %v608 = vpop.f32.mrf.mxu0
        %609 = vmatprep.mubr.bf16.mxu0 0
        %610 = vmatmul.mubr.bf16.gmra.mxu0 %v485
        %v611 = vpop.f32.mrf.mxu0
        %v612 = vadd.f32 %v362, %v611
        %v613 = vpop.f32.mrf.mxu0
        %v614 = vpop.f32.mrf.mxu0
        %v615 = vadd.f32 %v362, %v614
        %v616 = vpop.f32.mrf.mxu0
        %617 = vmatprep.mubr.bf16.mxu0 0
        %618 = vmatmul.mubr.bf16.gmra.mxu0 %v488
        %v619 = vpop.f32.mrf.mxu0
        %v620 = vadd.f32 %v362, %v619
        %v621 = vpop.f32.mrf.mxu0
        %v622 = vpop.f32.mrf.mxu0
        %v623 = vadd.f32 %v362, %v622
        %v624 = vpop.f32.mrf.mxu0
        %625 = vmatprep.mubr.bf16.mxu0 0
        %626 = vmatmul.mubr.bf16.gmra.mxu0 %v491
        %v627 = vpop.f32.mrf.mxu0
        %v628 = vadd.f32 %v362, %v627
        %v629 = vpop.f32.mrf.mxu0
        %v630 = vpop.f32.mrf.mxu0
        %v631 = vadd.f32 %v362, %v630
        %v632 = vpop.f32.mrf.mxu0
        %633 = vmatprep.mubr.bf16.mxu0 0
        %634 = vmatmul.mubr.bf16.gmra.mxu0 %v494
        %v635 = vpop.f32.mrf.mxu0
        %v636 = vadd.f32 %v362, %v635
        %v637 = vpop.f32.mrf.mxu0
        %v638 = vpop.f32.mrf.mxu0
        %v639 = vadd.f32 %v362, %v638
        %v640 = vpop.f32.mrf.mxu0
        %641 = vmatprep.mubr.bf16.mxu0 0
        %642 = vmatmul.mubr.bf16.gmra.mxu0 %v497
        %v643 = vpop.f32.mrf.mxu0
        %v644 = vadd.f32 %v362, %v643
        %v645 = vpop.f32.mrf.mxu0
        %v646 = vpop.f32.mrf.mxu0
        %v647 = vadd.f32 %v362, %v646
        %v648 = vpop.f32.mrf.mxu0
        %649 = vmatprep.mubr.bf16.mxu0 0
        %650 = vmatmul.mubr.bf16.gmra.mxu0 %v500
        %v651 = vpop.f32.mrf.mxu0
        %v652 = vadd.f32 %v362, %v651
        %v653 = vpop.f32.mrf.mxu0
        %v654 = vpop.f32.mrf.mxu0
        %v655 = vadd.f32 %v362, %v654
        %v656 = vpop.f32.mrf.mxu0
        %657 = vmatprep.mubr.bf16.mxu0 0
        %658 = vmatmul.mubr.bf16.gmra.mxu0 %v503
        %v659 = vpop.f32.mrf.mxu0
        %v660 = vadd.f32 %v362, %v659
        %v661 = vpop.f32.mrf.mxu0
        %v662 = vpop.f32.mrf.mxu0
        %v663 = vadd.f32 %v362, %v662
        %v664 = vpop.f32.mrf.mxu0
        %665 = vdwg.mxu0
        %v666 = vmax.f32 %v540, 0.0
        %v667 = vmax.f32 %v543, 0.0
        %v668 = vmax.f32 %v548, 0.0
        %v669 = vmax.f32 %v551, 0.0
        %v670 = vmax.f32 %v556, 0.0
        %v671 = vmax.f32 %v559, 0.0
        %v672 = vmax.f32 %v564, 0.0
        %v673 = vmax.f32 %v567, 0.0
        %v674 = vmax.f32 %v572, 0.0
        %v675 = vmax.f32 %v575, 0.0
        %v676 = vmax.f32 %v580, 0.0
        %v677 = vmax.f32 %v583, 0.0
        %v678 = vmax.f32 %v588, 0.0
        %v679 = vmax.f32 %v591, 0.0
        %v680 = vmax.f32 %v596, 0.0
        %v681 = vmax.f32 %v599, 0.0
        %v682 = vmax.f32 %v604, 0.0
        %v683 = vmax.f32 %v607, 0.0
        %v684 = vmax.f32 %v612, 0.0
        %v685 = vmax.f32 %v615, 0.0
        %v686 = vmax.f32 %v620, 0.0
        %v687 = vmax.f32 %v623, 0.0
        %v688 = vmax.f32 %v628, 0.0
        %v689 = vmax.f32 %v631, 0.0
        %v690 = vmax.f32 %v636, 0.0
        %v691 = vmax.f32 %v639, 0.0
        %v692 = vmax.f32 %v644, 0.0
        %v693 = vmax.f32 %v647, 0.0
        %v694 = vmax.f32 %v652, 0.0
        %v695 = vmax.f32 %v655, 0.0
        %v696 = vmax.f32 %v660, 0.0
        %v697 = vmax.f32 %v663, 0.0
        %v698 = vadd.f32 %v666, %v667
        %v699 = vadd.f32 %v698, %v668
        %v700 = vadd.f32 %v699, %v669
        %v701 = vadd.f32 %v700, %v670
        %v702 = vadd.f32 %v701, %v671
        %v703 = vadd.f32 %v702, %v672
        %v704 = vadd.f32 %v703, %v673
        %v705 = vadd.f32 %v704, %v674
        %v706 = vadd.f32 %v705, %v675
        %v707 = vadd.f32 %v706, %v676
        %v708 = vadd.f32 %v707, %v677
        %v709 = vadd.f32 %v708, %v678
        %v710 = vadd.f32 %v709, %v679
        %v711 = vadd.f32 %v710, %v680
        %v712 = vadd.f32 %v711, %v681
        %v713 = vadd.f32 %v712, %v682
        %v714 = vadd.f32 %v713, %v683
        %v715 = vadd.f32 %v714, %v684
        %v716 = vadd.f32 %v715, %v685
        %v717 = vadd.f32 %v716, %v686
        %v718 = vadd.f32 %v717, %v687
        %v719 = vadd.f32 %v718, %v688
        %v720 = vadd.f32 %v719, %v689
        %v721 = vadd.f32 %v720, %v690
        %v722 = vadd.f32 %v721, %v691
        %v723 = vadd.f32 %v722, %v692
        %v724 = vadd.f32 %v723, %v693
        %v725 = vadd.f32 %v724, %v694
        %v726 = vadd.f32 %v725, %v695
        %v727 = vadd.f32 %v726, %v696
        %v728 = vadd.f32 %v727, %v697
        %v729 = vrot.slane %v728, 4
        %v730 = vadd.f32 %v728, %v729
        %v731 = vrot.slane %v730, 2
        %v732 = vadd.f32 %v730, %v731
        %v733 = vrot.slane %v732, 1
        %v734 = vadd.f32 %v732, %v733
        %v735 = vrcp.pop 256.0
        %v736 = vmul.f32 %v734, %v735
        %v737 = vpack.c.bf16 %v736, %v736
        %v738 = vld [vmem:[%s3] sm:$0xf]
        %v739 = vld [vmem:[%s3 + $0x4] sm:$0xf]
        %v740 = vld [vmem:[%s3 + $0x8] sm:$0xf]
        %v741 = vld [vmem:[%s3 + $0xc] sm:$0xf]
        %v742 = vld [vmem:[%s3 + $0x10] sm:$0xf]
        %v743 = vld [vmem:[%s3 + $0x14] sm:$0xf]
        %v744 = vld [vmem:[%s3 + $0x18] sm:$0xf]
        %v745 = vld [vmem:[%s3 + $0x1c] sm:$0xf]
        %v746 = vld [vmem:[%s3 + $0x20] sm:$0xf]
        %v747 = vld [vmem:[%s3 + $0x24] sm:$0xf]
        %v748 = vld [vmem:[%s3 + $0x28] sm:$0xf]
        %v749 = vld [vmem:[%s3 + $0x2c] sm:$0xf]
        %v750 = vld [vmem:[%s3 + $0x30] sm:$0xf]
        %v751 = vld [vmem:[%s3 + $0x34] sm:$0xf]
        %v752 = vld [vmem:[%s3 + $0x38] sm:$0xf]
        %v753 = vld [vmem:[%s3 + $0x3c] sm:$0xf]
        %v754 = vld [vmem:[%s4] sm:$0x1]
        %v771 = vunpack.c.l.b16 %v738
        %v772 = vunpack.c.l.b16 %v739
        %v773 = vunpack.c.l.b16 %v740
        %v774 = vunpack.c.l.b16 %v741
        %v775 = vunpack.c.l.b16 %v742
        %v776 = vunpack.c.l.b16 %v743
        %v777 = vunpack.c.l.b16 %v744
        %v778 = vunpack.c.l.b16 %v745
        %v779 = vunpack.c.l.b16 %v746
        %v780 = vunpack.c.l.b16 %v747
        %v781 = vunpack.c.l.b16 %v748
        %v782 = vunpack.c.l.b16 %v749
        %v783 = vunpack.c.l.b16 %v750
        %v784 = vunpack.c.l.b16 %v751
        %v785 = vunpack.c.l.b16 %v752
        %v786 = vunpack.c.l.b16 %v753
        %v787 = vpack.c.b16 %v772, %v771
        %v788 = vpack.c.b16 %v774, %v773
        %v789 = vpack.c.b16 %v776, %v775
        %v790 = vpack.c.b16 %v778, %v777
        %v791 = vpack.c.b16 %v780, %v779
        %v792 = vpack.c.b16 %v782, %v781
        %v793 = vpack.c.b16 %v784, %v783
        %v794 = vpack.c.b16 %v786, %v785
        %803 = vmatprep.subr.bf16.mxu0 0
        %804 = vmatpush1.bf16.msra.mxu0 %v794
        %805 = vmatprep.subr.bf16.mxu0 0
        %806 = vmatpush1.bf16.msra.mxu0 %v793
        %807 = vmatprep.subr.bf16.mxu0 0
        %808 = vmatpush1.bf16.msra.mxu0 %v792
        %809 = vmatprep.subr.bf16.mxu0 0
        %810 = vmatpush1.bf16.msra.mxu0 %v791
        %811 = vmatprep.subr.bf16.mxu0 0
        %812 = vmatpush1.bf16.msra.mxu0 %v790
        %813 = vmatprep.subr.bf16.mxu0 0
        %814 = vmatpush1.bf16.msra.mxu0 %v789
        %815 = vmatprep.subr.bf16.mxu0 0
        %816 = vmatpush1.bf16.msra.mxu0 %v788
        %817 = vmatprep.subr.bf16.mxu0 0
        %818 = vmatpush1.bf16.msra.mxu0 %v787
        %819 = vmatprep.subr.bf16.mxu0 0
        %820 = vmatpush2.bf16.msra.mxu0 0
        %821 = vmatprep.subr.bf16.mxu0 0
        %822 = vmatpush2.bf16.msra.mxu0 0
        %823 = vmatprep.subr.bf16.mxu0 0
        %824 = vmatpush2.bf16.msra.mxu0 0
        %825 = vmatprep.subr.bf16.mxu0 0
        %826 = vmatpush2.bf16.msra.mxu0 0
        %827 = vmatprep.subr.bf16.mxu0 0
        %828 = vmatpush2.bf16.msra.mxu0 0
        %829 = vmatprep.subr.bf16.mxu0 0
        %830 = vmatpush2.bf16.msra.mxu0 0
        %831 = vmatprep.subr.bf16.mxu0 0
        %832 = vmatpush2.bf16.msra.mxu0 0
        %833 = vmatprep.subr.bf16.mxu0 0
        %834 = vmatpush2.bf16.msra.mxu0 0
        %835 = vmatprep.mubr.bf16.mxu0 0
        %836 = vmatmul.mubr.bf16.gmra.mxu0 %v737
        %v837 = vpop.f32.mrf.mxu0
        %v838 = vadd.f32 %v754, %v837
        %v839 = vpop.f32.mrf.mxu0
        %v840 = vpop.f32.mrf.mxu0
        %v841 = vpop.f32.mrf.mxu0
        %842 = vdwg.mxu0
        %v843 = vtanh.pop %v838
        %v844 = vpack.c.bf16 %v843, %v843
        %v845 = vld [vmem:[%s5] sm:$0xf]
        %v846 = vld [vmem:[%s5 + $0x4] sm:$0xf]
        %v847 = vld [vmem:[%s5 + $0x8] sm:$0xf]
        %v848 = vld [vmem:[%s5 + $0xc] sm:$0xf]
        %v849 = vld [vmem:[%s5 + $0x10] sm:$0xf]
        %v850 = vld [vmem:[%s5 + $0x14] sm:$0xf]
        %v851 = vld [vmem:[%s5 + $0x18] sm:$0xf]
        %v852 = vld [vmem:[%s5 + $0x1c] sm:$0xf]
        %v853 = vld [vmem:[%s5 + $0x20] sm:$0xf]
        %v854 = vld [vmem:[%s5 + $0x24] sm:$0xf]
        %v855 = vld [vmem:[%s5 + $0x28] sm:$0xf]
        %v856 = vld [vmem:[%s5 + $0x2c] sm:$0xf]
        %v857 = vld [vmem:[%s5 + $0x30] sm:$0xf]
        %v858 = vld [vmem:[%s5 + $0x34] sm:$0xf]
        %v859 = vld [vmem:[%s5 + $0x38] sm:$0xf]
        %v860 = vld [vmem:[%s5 + $0x3c] sm:$0xf]
        %v877 = vunpack.c.l.b16 %v845
        %v878 = vunpack.c.l.b16 %v846
        %v879 = vunpack.c.l.b16 %v847
        %v880 = vunpack.c.l.b16 %v848
        %v881 = vunpack.c.l.b16 %v849
        %v882 = vunpack.c.l.b16 %v850
        %v883 = vunpack.c.l.b16 %v851
        %v884 = vunpack.c.l.b16 %v852
        %v885 = vunpack.c.l.b16 %v853
        %v886 = vunpack.c.l.b16 %v854
        %v887 = vunpack.c.l.b16 %v855
        %v888 = vunpack.c.l.b16 %v856
        %v889 = vunpack.c.l.b16 %v857
        %v890 = vunpack.c.l.b16 %v858
        %v891 = vunpack.c.l.b16 %v859
        %v892 = vunpack.c.l.b16 %v860
        %v893 = vpack.c.b16 %v878, %v877
        %v894 = vpack.c.b16 %v880, %v879
        %v895 = vpack.c.b16 %v882, %v881
        %v896 = vpack.c.b16 %v884, %v883
        %v897 = vpack.c.b16 %v886, %v885
        %v898 = vpack.c.b16 %v888, %v887
        %v899 = vpack.c.b16 %v890, %v889
        %v900 = vpack.c.b16 %v892, %v891
        %909 = vmatprep.subr.bf16.mxu0 0
        %910 = vmatpush1.bf16.msra.mxu0 %v900
        %911 = vmatprep.subr.bf16.mxu0 0
        %912 = vmatpush1.bf16.msra.mxu0 %v899
        %913 = vmatprep.subr.bf16.mxu0 0
        %914 = vmatpush1.bf16.msra.mxu0 %v898
        %915 = vmatprep.subr.bf16.mxu0 0
        %916 = vmatpush1.bf16.msra.mxu0 %v897
        %917 = vmatprep.subr.bf16.mxu0 0
        %918 = vmatpush1.bf16.msra.mxu0 %v896
        %919 = vmatprep.subr.bf16.mxu0 0
        %920 = vmatpush1.bf16.msra.mxu0 %v895
        %921 = vmatprep.subr.bf16.mxu0 0
        %922 = vmatpush1.bf16.msra.mxu0 %v894
        %923 = vmatprep.subr.bf16.mxu0 0
        %924 = vmatpush1.bf16.msra.mxu0 %v893
        %925 = vmatprep.subr.bf16.mxu0 0
        %926 = vmatpush2.bf16.msra.mxu0 0
        %927 = vmatprep.subr.bf16.mxu0 0
        %928 = vmatpush2.bf16.msra.mxu0 0
        %929 = vmatprep.subr.bf16.mxu0 0
        %930 = vmatpush2.bf16.msra.mxu0 0
        %931 = vmatprep.subr.bf16.mxu0 0
        %932 = vmatpush2.bf16.msra.mxu0 0
        %933 = vmatprep.subr.bf16.mxu0 0
        %934 = vmatpush2.bf16.msra.mxu0 0
        %935 = vmatprep.subr.bf16.mxu0 0
        %936 = vmatpush2.bf16.msra.mxu0 0
        %937 = vmatprep.subr.bf16.mxu0 0
        %938 = vmatpush2.bf16.msra.mxu0 0
        %939 = vmatprep.subr.bf16.mxu0 0
        %940 = vmatpush2.bf16.msra.mxu0 0
        %941 = vmatprep.mubr.bf16.mxu0 0
        %942 = vmatmul.mubr.bf16.gmra.mxu0 %v844
        %v943 = vpop.f32.mrf.mxu0
        %v944 = vadd.f32 0.0, %v943
        %v945 = vpop.f32.mrf.mxu0
        %v946 = vpop.f32.mrf.mxu0
        %v947 = vpop.f32.mrf.mxu0
        %948 = vdwg.mxu0
        %v949 = vld [vmem:[%s6] sm:$0xff]
        %v950 = vlaneseq
        %v951 = vshrl.u32 %v950, 7
        %v952 = vsub.s32 0, %v951
        %v953 = vrot.slane %v944, %v952
        %v954 = vadd.f32 %v953, %v949
        %v955 = vld [vmem:[%s319] sm:$0xff]
        %v956 = vadd.f32 %v954, %v955
        %957 = vmax.xlane.f32.xlu0 %v956
        %v958 = vpop.xlane.xlu0 %957
        %v959 = vlaneseq
        %v960 = vand.u32 %v959, 127
        %vm961 = vcmp.ge.f32.partialorder %v956, %v958
        %v962 = vsel %vm961, %v960, 128
        %v963 = vand.u32 %v962, 65535
        %v964 = vshra.s32 %v962, 16
        %v965 = vcvt.s32.f32 %v963
        %v966 = vcvt.s32.f32 %v964
        %967 = vmin.xlane.f32.xlu0 %v966
        %v968 = vpop.xlane.xlu0 %967
        %vm969 = vcmp.eq.f32.partialorder %v966, %v968
        %v970 = vsel %vm969, %v965, inf
        %971 = vmin.xlane.f32.xlu0 %v970
        %v972 = vpop.xlane.xlu0 %971
        %v973 = vcvt.f32.s32 %v972
        %v974 = vcvt.f32.s32 %v968
        %v975 = vshll.u32 %v974, 16
        %v976 = vadd.s32 %v975, %v973
        %v977 = vlaneseq
        %v978 = vshrl.u32 %v977, 7
        %v979 = vsub.s32 %v960, %v978
        %v980 = vrot.slane %v976, %v979
        %vm981 = vcmask 57344
        %982 = vst.msk [vmem:[%s310] sm:$0x1] %vm981, %v980
        %s983 = sand.u32 %s208, 1
        %s984 = scalar_lea.sflag [#allocation3], %s983
        %s985 = sand.u32 %s208, 1
        %s986 = scalar_lea.vmem [#allocation2], %s985
        // Predicated region
        $region53: #{ingredients_forward.1} parent=51 // pred_check
          %p987 = pneg %p218
        $region54: #{ingredients_forward.1} parent=51 // pred_check_branch
          %989 = sbr.rel (%p987) target = $region56
        $region55: #{ingredients_forward.1} parent=51 // pred_region
          %s991 = ssub.s32 16, 16
          %992 = vsyncadd %s984, %s991
          %s993 = smul.addr %s22, 16
          %s994 = scalar_lea.hbm %s8, %s993
          %s996 = sshll.u32 %s986, 4
          %s997 = int_to_ptr.vmem [resolvable:$true] %s996
          %999 = dma.vmem_to_hbm [thread:$0]  %s997, 16, %s994, %s984
        $region56: #{ingredients_forward.1} parent=51 // pred_fallthru
          _
      $region52: #{ingredients_forward.1} parent=5 // pred_fallthru
        _
      %p1000 = scmp.le.s32.totalorder 2, %s17
      // Predicated region
      $region57: #{ingredients_forward.1} parent=5 // pred_check
        %p1001 = pneg %p1000
      $region58: #{ingredients_forward.1} parent=5 // pred_check_branch
        %1003 = sbr.rel (%p1001) target = $region60
      $region59: #{ingredients_forward.1} parent=5 // pred_region
        %s1004 = ssub.s32 %s17, 2
        // Predicated region
        $region61: #{ingredients_forward.1} parent=59 // pred_check
          %p1005 = pneg %p224
        $region62: #{ingredients_forward.1} parent=59 // pred_check_branch
          %1007 = sbr.rel (%p1005) target = $region64
        $region63: #{ingredients_forward.1} parent=59 // pred_region
          %s1008 = sand.u32 %s209, 1
          %s1009 = scalar_lea.sflag [#allocation3], %s1008
          %s1010 = sand.u32 %s209, 1
          %s1011 = scalar_lea.vmem [#allocation2], %s1010
          %1012 = dma.done %s1009, 16
        $region64: #{ingredients_forward.1} parent=59 // pred_fallthru
          _
      $region60: #{ingredients_forward.1} parent=5 // pred_fallthru
        _
    $region6: #{ingredients_forward.1} parent=1 // loop_footer
      %s21 = sadd.s32 1, %s17
    $region7: #{ingredients_forward.1} parent=1 // loop_footer_branch
      %16 = sbr.rel target = $region3
    $region8: #{ingredients_forward.1} parent=1 // loop_exit
      _
    %1013 = vsyncpa [#allocation3], 1
    %s1014 = scalar_lea.sflag [#allocation3], 1
    %1015 = vsyncpa %s1014, 1

</llo_original>
